<compile_context>
chip_gen: v7x
topology: tpu7x:2x2x1
jax: 0.10.0
libtpu: 0.0.40
codegen_flags: <defaults>
</compile_context>

<pallas_src>
import jax
import jax.numpy as jnp
from jax import lax
from jax.experimental import pallas as pl
from jax.experimental.pallas import tpu as pltpu


def _vmem_limit_bytes():
    """Per-generation VMEM-derived scoped limit (v5e/v6e 128 MiB, v7x 64 MiB)."""
    try:
        cap = int(pltpu.get_tpu_info().vmem_capacity_bytes)
    except Exception:
        cap = 64 * 1024 * 1024          # conservative fallback (v7x per-core VMEM)
    return max(16 * 1024 * 1024, min(cap // 2, 64 * 1024 * 1024))


def _pick_row_block(h, max_rows=256):
    """Row block: divides H and is a multiple of 8 (or equals H)."""
    if h <= max_rows:
        return h
    cand = max_rows - (max_rows % 8)
    while cand >= 8:
        if h % cand == 0:
            return cand
        cand -= 8
    return h                             # awkward H: single full-height block


def _pick_bc_block(bc, img_block_bytes, budget_bytes, max_imgs=8):
    """Images per grid step: divides BC, fits VMEM budget, leaves >=2 grid steps (megacore)."""
    best = 1
    for cand in range(2, min(bc, max_imgs) + 1):
        if bc % cand:
            continue
        if cand * img_block_bytes > budget_bytes:
            continue
        if bc // cand < 2:
            continue
        best = cand
    return best


def _make_kernel(n_blk, h_blk, w_dim, p_dim):
    """Kernel over an (n_blk, 2, h_blk, W) fused prev/curr block -> (n_blk, h_blk, W)."""
    pad = (p_dim != w_dim)
    n_stages = max(1, (p_dim - 1).bit_length())

    def kernel(alpha_ref, wx_ref, d_ref, rot_ref, fs_ref, out_ref, *scratch):
        a = alpha_ref[...]                                   # (h_blk, 1) f32
        wx = wx_ref[...]                                     # (h_blk, 1) f32
        d = d_ref[...]                                       # (h_blk, 1) i32
        rot = rot_ref[...]                                   # (h_blk, 1) i32

        # Hoisted per-row quantities (shared by every image in the block).
        lane = lax.broadcasted_iota(jnp.int32, (1, p_dim), 1)
        src = lane + d                                       # (h_blk, P)
        m0 = (src >= 0) & (src < w_dim)                      # tap at w + d
        m1 = (src >= -1) & (src < w_dim - 1)                 # tap at w + d + 1
        take = [(rot & (1 << b)) != 0 for b in range(n_stages)]

        for n in range(n_blk):                               # static, small unroll
            prev = fs_ref[n, 0].astype(jnp.float32)          # (h_blk, W)
            curr = fs_ref[n, 1].astype(jnp.float32)
            frame = (1.0 - a) * curr + a * prev              # per-row temporal blend

            if pad:
                fpad = scratch[0]                            # (h_blk, P) f32, no zero-fill
                fpad[:, :w_dim] = frame
                x = fpad[...]
            else:
                x = frame                                    # W is already lane-aligned

            # Barrel shift: compose static rolls by 2**b, selected per row via rot's bits,
            # so tap0[r, w] = frame[r, (w + d_r) mod P].
            for b in range(n_stages):
                rolled = pltpu.roll(x, 1 << b, axis=1)
                x = jnp.where(take[b], rolled, x)
            tap1 = pltpu.roll(x, p_dim - 1, axis=1)          # frame[r, (w + d_r + 1) mod P]

            t0 = jnp.where(m0, x, 0.0)
            t1 = jnp.where(m1, tap1, 0.0)
            res = (1.0 - wx) * t0 + wx * t1                  # (h_blk, P) f32

            out_ref[n] = res[:, :w_dim].astype(out_ref.dtype)

    return kernel


def row_temporal_shift_interp(frame_stack, row_shifts, row_temporal_shifts):
    """frame_stack: (B, C, T>=2, H, W) -> (B, C, H, W)."""
    B, C, T, H, W = frame_stack.shape
    assert T >= 2
    dtype = frame_stack.dtype
    BC = B * C
    fs = frame_stack.reshape(BC, T, H, W)        # free reshape, no transpose

    h_blk = _pick_row_block(H)
    n_hblk = H // h_blk
    pad = (W % 128 != 0)
    P = ((W + 127) // 128) * 128 if pad else W   # lane width used by the rolls

    vmem_limit = _vmem_limit_bytes()
    # fused input (2 frames) + output, double-buffered, per image row-slab
    img_block_bytes = h_blk * W * dtype.itemsize * (2 + 1) * 2
    n_blk = _pick_bc_block(BC, img_block_bytes, vmem_limit // 4)

    f32 = jnp.float32
    neg = -row_shifts.astype(f32)                # (H,)
    d_f = jnp.floor(neg)
    wx = (neg - d_f).astype(f32)                 # fractional weight in [0, 1)
    d_i = d_f.astype(jnp.int32)                  # integer lane offset
    rot = jnp.mod(-d_i, jnp.int32(P)).astype(jnp.int32)     # roll amount in [0, P)

    alpha = jnp.zeros((H,), f32).at[1::2].set(row_temporal_shifts.astype(f32))

    alpha_col = alpha.reshape(H, 1)
    wx_col = wx.reshape(H, 1)
    d_col = d_i.reshape(H, 1)
    rot_col = rot.reshape(H, 1)

    col_spec = pl.BlockSpec((h_blk, 1), lambda n, hb: (hb, 0))
    fs_spec = pl.BlockSpec((n_blk, 2, h_blk, W), lambda n, hb: (n, 0, hb, 0))
    out_spec = pl.BlockSpec((n_blk, h_blk, W), lambda n, hb: (n, hb, 0))
    scratch = [pltpu.VMEM((h_blk, P), jnp.float32)] if pad else []

    out = pl.pallas_call(
        _make_kernel(n_blk, h_blk, W, P),
        out_shape=jax.ShapeDtypeStruct((BC, H, W), dtype),
        grid=(BC // n_blk, n_hblk),
        in_specs=[col_spec, col_spec, col_spec, col_spec, fs_spec],
        out_specs=out_spec,
        scratch_shapes=scratch,
        compiler_params=pltpu.CompilerParams(
            dimension_semantics=("parallel", "parallel"),
            vmem_limit_bytes=vmem_limit),
    )(alpha_col, wx_col, d_col, rot_col, fs)

    return out.reshape(B, C, H, W)


def ref_forward(frame_stack, row_shifts, row_temporal_shifts):
    """Pure-JAX reference of the torch forward (grid_sample reduced analytically)."""
    B, C, T, H, W = frame_stack.shape
    dtype = frame_stack.dtype
    prev = frame_stack[:, :, 0]
    curr = frame_stack[:, :, 1]
    alpha = jnp.zeros((H,), dtype).at[1::2].set(row_temporal_shifts.astype(dtype))
    alpha = alpha[None, None, :, None]
    frame = (1.0 - alpha) * curr + alpha * prev

    w = jnp.arange(W, dtype=dtype)[None, :]
    src = w - row_shifts[:, None].astype(dtype)   # (H, W)
    x0 = jnp.floor(src)
    wx = src - x0
    x0i = x0.astype(jnp.int32)

    def tap(xi):
        valid = (xi >= 0) & (xi < W)
        xc = jnp.clip(xi, 0, W - 1)
        idx = jnp.broadcast_to(xc[None, None], frame.shape)
        g = jnp.take_along_axis(frame, idx, axis=3)
        return jnp.where(valid[None, None], g, jnp.zeros_like(g))

    return (1.0 - wx)[None, None] * tap(x0i) + wx[None, None] * tap(x0i + 1)


if __name__ == "__main__":
    key = jax.random.PRNGKey(0)
    k1, k2, k3, k4, k5, k6 = jax.random.split(key, 6)

    # Case 1: small module-like shapes (lane-padded path, W < 128).
    B, C, T, H, W = 2, 4, 2, 16, 16
    row_shifts = jax.random.uniform(k1, (H,), jnp.float32, -3.0, 3.0)
    row_temporal_shifts = jax.random.uniform(k2, (H // 2,), jnp.float32, 0.0, 1.0)
    frame_stack = jax.random.normal(k3, (B, C, T, H, W), jnp.float32)

    out = row_temporal_shift_interp(frame_stack, row_shifts, row_temporal_shifts)
    out = jax.block_until_ready(out)
    ref = ref_forward(frame_stack, row_shifts, row_temporal_shifts)
    assert out.shape == (B, C, H, W)
    assert out.dtype == frame_stack.dtype
    assert jnp.allclose(out, ref, rtol=1e-5, atol=1e-5), "Pallas kernel mismatch vs reference (pad path)"

    # Case 2: lane-aligned path (W % 128 == 0) + |shift| > W rows (locks in big-shift behavior).
    B2, C2, T2, H2, W2 = 1, 2, 2, 8, 128
    shifts2 = jax.random.uniform(k4, (H2,), jnp.float32, -5.0, 5.0)
    shifts2 = shifts2.at[0].set(200.5).at[1].set(-150.25)
    temporal2 = jax.random.uniform(k5, (H2 // 2,), jnp.float32, 0.0, 1.0)
    fs2 = jax.random.normal(k6, (B2, C2, T2, H2, W2), jnp.float32)

    out2 = jax.block_until_ready(row_temporal_shift_interp(fs2, shifts2, temporal2))
    ref2 = ref_forward(fs2, shifts2, temporal2)
    assert jnp.allclose(out2, ref2, rtol=1e-5, atol=1e-5), "Pallas kernel mismatch vs reference (aligned path)"

    print("KERNEL_OK")
</pallas_src>

<mosaic_0001>
module attributes {stable_mosaic.version = 11 : i64} {
  func.func @kernel(%arg0: i32, %arg1: i32, %arg2: memref<16x1xf32, #tpu.memory_space<vmem>>, %arg3: memref<16x1xf32, #tpu.memory_space<vmem>>, %arg4: memref<16x1xi32, #tpu.memory_space<vmem>>, %arg5: memref<16x1xi32, #tpu.memory_space<vmem>>, %arg6: memref<4x2x16x16xf32, #tpu.memory_space<vmem>>, %arg7: memref<4x16x16xf32, #tpu.memory_space<vmem>>, %arg8: memref<16x128xf32, #tpu.memory_space<vmem>>) attributes {dimension_semantics = [#tpu.dimension_semantics<parallel>, #tpu.dimension_semantics<parallel>], iteration_bounds = array<i64: 2, 1>, scalar_prefetch = 0 : i64, scratch_operands = 1 : i64, tpu.core_type = #tpu.core_type<tc>, window_params = [{transform_indices = @transform_0, window_bounds = array<i64: 16, 1>}, {transform_indices = @transform_1, window_bounds = array<i64: 16, 1>}, {transform_indices = @transform_2, window_bounds = array<i64: 16, 1>}, {transform_indices = @transform_3, window_bounds = array<i64: 16, 1>}, {transform_indices = @transform_4, window_bounds = array<i64: 4, 2, 16, 16>}, {transform_indices = @transform_5, window_bounds = array<i64: 4, 16, 16>}]} {
    %c0 = arith.constant 0 : index
    %c0_0 = arith.constant 0 : index
    %0 = vector.load %arg2[%c0, %c0_0] : memref<16x1xf32, #tpu.memory_space<vmem>>, vector<16x1xf32>
    %c0_1 = arith.constant 0 : index
    %c0_2 = arith.constant 0 : index
    %1 = vector.load %arg3[%c0_1, %c0_2] : memref<16x1xf32, #tpu.memory_space<vmem>>, vector<16x1xf32>
    %c0_3 = arith.constant 0 : index
    %c0_4 = arith.constant 0 : index
    %2 = vector.load %arg4[%c0_3, %c0_4] : memref<16x1xi32, #tpu.memory_space<vmem>>, vector<16x1xi32>
    %c0_5 = arith.constant 0 : index
    %c0_6 = arith.constant 0 : index
    %3 = vector.load %arg5[%c0_5, %c0_6] : memref<16x1xi32, #tpu.memory_space<vmem>>, vector<16x1xi32>
    %4 = tpu.iota {dimensions = array<i32: 1>} : vector<1x128xi32>
    %5 = vector.broadcast %4 : vector<1x128xi32> to vector<16x128xi32>
    %6 = vector.broadcast %2 : vector<16x1xi32> to vector<16x128xi32>
    %7 = arith.addi %5, %6 : vector<16x128xi32>
    %c0_i32 = arith.constant 0 : i32
    %8 = vector.broadcast %c0_i32 : i32 to vector<16x128xi32>
    %9 = arith.cmpi sge, %7, %8 : vector<16x128xi32>
    %c16_i32 = arith.constant 16 : i32
    %10 = vector.broadcast %c16_i32 : i32 to vector<16x128xi32>
    %11 = arith.cmpi slt, %7, %10 : vector<16x128xi32>
    %12 = arith.andi %9, %11 : vector<16x128xi1>
    %c-1_i32 = arith.constant -1 : i32
    %13 = vector.broadcast %c-1_i32 : i32 to vector<16x128xi32>
    %14 = arith.cmpi sge, %7, %13 : vector<16x128xi32>
    %c15_i32 = arith.constant 15 : i32
    %15 = vector.broadcast %c15_i32 : i32 to vector<16x128xi32>
    %16 = arith.cmpi slt, %7, %15 : vector<16x128xi32>
    %17 = arith.andi %14, %16 : vector<16x128xi1>
    %c1_i32 = arith.constant 1 : i32
    %18 = vector.broadcast %c1_i32 : i32 to vector<16x1xi32>
    %19 = arith.andi %3, %18 : vector<16x1xi32>
    %c0_i32_7 = arith.constant 0 : i32
    %20 = vector.broadcast %c0_i32_7 : i32 to vector<16x1xi32>
    %21 = arith.cmpi ne, %19, %20 : vector<16x1xi32>
    %c2_i32 = arith.constant 2 : i32
    %22 = vector.broadcast %c2_i32 : i32 to vector<16x1xi32>
    %23 = arith.andi %3, %22 : vector<16x1xi32>
    %c0_i32_8 = arith.constant 0 : i32
    %24 = vector.broadcast %c0_i32_8 : i32 to vector<16x1xi32>
    %25 = arith.cmpi ne, %23, %24 : vector<16x1xi32>
    %c4_i32 = arith.constant 4 : i32
    %26 = vector.broadcast %c4_i32 : i32 to vector<16x1xi32>
    %27 = arith.andi %3, %26 : vector<16x1xi32>
    %c0_i32_9 = arith.constant 0 : i32
    %28 = vector.broadcast %c0_i32_9 : i32 to vector<16x1xi32>
    %29 = arith.cmpi ne, %27, %28 : vector<16x1xi32>
    %c8_i32 = arith.constant 8 : i32
    %30 = vector.broadcast %c8_i32 : i32 to vector<16x1xi32>
    %31 = arith.andi %3, %30 : vector<16x1xi32>
    %c0_i32_10 = arith.constant 0 : i32
    %32 = vector.broadcast %c0_i32_10 : i32 to vector<16x1xi32>
    %33 = arith.cmpi ne, %31, %32 : vector<16x1xi32>
    %c16_i32_11 = arith.constant 16 : i32
    %34 = vector.broadcast %c16_i32_11 : i32 to vector<16x1xi32>
    %35 = arith.andi %3, %34 : vector<16x1xi32>
    %c0_i32_12 = arith.constant 0 : i32
    %36 = vector.broadcast %c0_i32_12 : i32 to vector<16x1xi32>
    %37 = arith.cmpi ne, %35, %36 : vector<16x1xi32>
    %c32_i32 = arith.constant 32 : i32
    %38 = vector.broadcast %c32_i32 : i32 to vector<16x1xi32>
    %39 = arith.andi %3, %38 : vector<16x1xi32>
    %c0_i32_13 = arith.constant 0 : i32
    %40 = vector.broadcast %c0_i32_13 : i32 to vector<16x1xi32>
    %41 = arith.cmpi ne, %39, %40 : vector<16x1xi32>
    %c64_i32 = arith.constant 64 : i32
    %42 = vector.broadcast %c64_i32 : i32 to vector<16x1xi32>
    %43 = arith.andi %3, %42 : vector<16x1xi32>
    %c0_i32_14 = arith.constant 0 : i32
    %44 = vector.broadcast %c0_i32_14 : i32 to vector<16x1xi32>
    %45 = arith.cmpi ne, %43, %44 : vector<16x1xi32>
    %c0_15 = arith.constant 0 : index
    %c0_16 = arith.constant 0 : index
    %c0_17 = arith.constant 0 : index
    %c0_18 = arith.constant 0 : index
    %46 = vector.load %arg6[%c0_15, %c0_16, %c0_17, %c0_18] : memref<4x2x16x16xf32, #tpu.memory_space<vmem>>, vector<1x1x16x16xf32>
    %47 = vector.shape_cast %46 : vector<1x1x16x16xf32> to vector<16x16xf32>
    %c0_19 = arith.constant 0 : index
    %c1 = arith.constant 1 : index
    %c0_20 = arith.constant 0 : index
    %c0_21 = arith.constant 0 : index
    %48 = vector.load %arg6[%c0_19, %c1, %c0_20, %c0_21] : memref<4x2x16x16xf32, #tpu.memory_space<vmem>>, vector<1x1x16x16xf32>
    %49 = vector.shape_cast %48 : vector<1x1x16x16xf32> to vector<16x16xf32>
    %cst = arith.constant 1.000000e+00 : f32
    %50 = vector.broadcast %cst : f32 to vector<16x1xf32>
    %51 = arith.subf %50, %0 : vector<16x1xf32>
    %52 = vector.broadcast %51 : vector<16x1xf32> to vector<16x16xf32>
    %53 = arith.mulf %52, %49 : vector<16x16xf32>
    %54 = vector.broadcast %0 : vector<16x1xf32> to vector<16x16xf32>
    %55 = arith.mulf %54, %47 : vector<16x16xf32>
    %56 = arith.addf %53, %55 : vector<16x16xf32>
    %c0_22 = arith.constant 0 : index
    %c0_23 = arith.constant 0 : index
    %57 = vector.load %arg8[%c0_22, %c0_23] : memref<16x128xf32, #tpu.memory_space<vmem>>, vector<16x16xf32>
    tpu.vector_store %arg8[%c0_22, %c0_23], %56 {strides = array<i32>} : memref<16x128xf32, #tpu.memory_space<vmem>>, vector<16x16xf32>,
    %c0_24 = arith.constant 0 : index
    %c0_25 = arith.constant 0 : index
    %58 = vector.load %arg8[%c0_24, %c0_25] : memref<16x128xf32, #tpu.memory_space<vmem>>, vector<16x128xf32>
    %c1_i32_26 = arith.constant 1 : i32
    %59 = tpu.dynamic_rotate %58 by %c1_i32_26 dim 1 : vector<16x128xf32>, i32 -> vector<16x128xf32>
    %60 = vector.shape_cast %21 : vector<16x1xi1> to vector<16x1xi1>
    %61 = vector.broadcast %60 : vector<16x1xi1> to vector<16x128xi1>
    %62 = arith.select %61, %59, %58 : vector<16x128xi1>, vector<16x128xf32>
    %c2_i32_27 = arith.constant 2 : i32
    %63 = tpu.dynamic_rotate %62 by %c2_i32_27 dim 1 : vector<16x128xf32>, i32 -> vector<16x128xf32>
    %64 = vector.shape_cast %25 : vector<16x1xi1> to vector<16x1xi1>
    %65 = vector.broadcast %64 : vector<16x1xi1> to vector<16x128xi1>
    %66 = arith.select %65, %63, %62 : vector<16x128xi1>, vector<16x128xf32>
    %c4_i32_28 = arith.constant 4 : i32
    %67 = tpu.dynamic_rotate %66 by %c4_i32_28 dim 1 : vector<16x128xf32>, i32 -> vector<16x128xf32>
    %68 = vector.shape_cast %29 : vector<16x1xi1> to vector<16x1xi1>
    %69 = vector.broadcast %68 : vector<16x1xi1> to vector<16x128xi1>
    %70 = arith.select %69, %67, %66 : vector<16x128xi1>, vector<16x128xf32>
    %c8_i32_29 = arith.constant 8 : i32
    %71 = tpu.dynamic_rotate %70 by %c8_i32_29 dim 1 : vector<16x128xf32>, i32 -> vector<16x128xf32>
    %72 = vector.shape_cast %33 : vector<16x1xi1> to vector<16x1xi1>
    %73 = vector.broadcast %72 : vector<16x1xi1> to vector<16x128xi1>
    %74 = arith.select %73, %71, %70 : vector<16x128xi1>, vector<16x128xf32>
    %c16_i32_30 = arith.constant 16 : i32
    %75 = tpu.dynamic_rotate %74 by %c16_i32_30 dim 1 : vector<16x128xf32>, i32 -> vector<16x128xf32>
    %76 = vector.shape_cast %37 : vector<16x1xi1> to vector<16x1xi1>
    %77 = vector.broadcast %76 : vector<16x1xi1> to vector<16x128xi1>
    %78 = arith.select %77, %75, %74 : vector<16x128xi1>, vector<16x128xf32>
    %c32_i32_31 = arith.constant 32 : i32
    %79 = tpu.dynamic_rotate %78 by %c32_i32_31 dim 1 : vector<16x128xf32>, i32 -> vector<16x128xf32>
    %80 = vector.shape_cast %41 : vector<16x1xi1> to vector<16x1xi1>
    %81 = vector.broadcast %80 : vector<16x1xi1> to vector<16x128xi1>
    %82 = arith.select %81, %79, %78 : vector<16x128xi1>, vector<16x128xf32>
    %c64_i32_32 = arith.constant 64 : i32
    %83 = tpu.dynamic_rotate %82 by %c64_i32_32 dim 1 : vector<16x128xf32>, i32 -> vector<16x128xf32>
    %84 = vector.shape_cast %45 : vector<16x1xi1> to vector<16x1xi1>
    %85 = vector.broadcast %84 : vector<16x1xi1> to vector<16x128xi1>
    %86 = arith.select %85, %83, %82 : vector<16x128xi1>, vector<16x128xf32>
    %c127_i32 = arith.constant 127 : i32
    %87 = tpu.dynamic_rotate %86 by %c127_i32 dim 1 : vector<16x128xf32>, i32 -> vector<16x128xf32>
    %cst_33 = arith.constant 0.000000e+00 : f32
    %88 = vector.broadcast %cst_33 : f32 to vector<16x128xf32>
    %89 = arith.select %12, %86, %88 : vector<16x128xi1>, vector<16x128xf32>
    %cst_34 = arith.constant 0.000000e+00 : f32
    %90 = vector.broadcast %cst_34 : f32 to vector<16x128xf32>
    %91 = arith.select %17, %87, %90 : vector<16x128xi1>, vector<16x128xf32>
    %cst_35 = arith.constant 1.000000e+00 : f32
    %92 = vector.broadcast %cst_35 : f32 to vector<16x1xf32>
    %93 = arith.subf %92, %1 : vector<16x1xf32>
    %94 = vector.broadcast %93 : vector<16x1xf32> to vector<16x128xf32>
    %95 = arith.mulf %94, %89 : vector<16x128xf32>
    %96 = vector.broadcast %1 : vector<16x1xf32> to vector<16x128xf32>
    %97 = arith.mulf %96, %91 : vector<16x128xf32>
    %98 = arith.addf %95, %97 : vector<16x128xf32>
    %99 = vector.extract_strided_slice %98 {offsets = [0, 0], sizes = [16, 16], strides = [1, 1]} : vector<16x128xf32> to vector<16x16xf32>
    %c0_36 = arith.constant 0 : index
    %c0_37 = arith.constant 0 : index
    %c0_38 = arith.constant 0 : index
    %100 = vector.load %arg7[%c0_36, %c0_37, %c0_38] : memref<4x16x16xf32, #tpu.memory_space<vmem>>, vector<1x16x16xf32>
    %101 = vector.shape_cast %100 : vector<1x16x16xf32> to vector<16x16xf32>
    %102 = vector.shape_cast %99 : vector<16x16xf32> to vector<1x16x16xf32>
    tpu.vector_store %arg7[%c0_36, %c0_37, %c0_38], %102 {strides = array<i32>} : memref<4x16x16xf32, #tpu.memory_space<vmem>>, vector<1x16x16xf32>,
    %c1_39 = arith.constant 1 : index
    %c0_40 = arith.constant 0 : index
    %c0_41 = arith.constant 0 : index
    %c0_42 = arith.constant 0 : index
    %103 = vector.load %arg6[%c1_39, %c0_40, %c0_41, %c0_42] : memref<4x2x16x16xf32, #tpu.memory_space<vmem>>, vector<1x1x16x16xf32>
    %104 = vector.shape_cast %103 : vector<1x1x16x16xf32> to vector<16x16xf32>
    %c1_43 = arith.constant 1 : index
    %c1_44 = arith.constant 1 : index
    %c0_45 = arith.constant 0 : index
    %c0_46 = arith.constant 0 : index
    %105 = vector.load %arg6[%c1_43, %c1_44, %c0_45, %c0_46] : memref<4x2x16x16xf32, #tpu.memory_space<vmem>>, vector<1x1x16x16xf32>
    %106 = vector.shape_cast %105 : vector<1x1x16x16xf32> to vector<16x16xf32>
    %cst_47 = arith.constant 1.000000e+00 : f32
    %107 = vector.broadcast %cst_47 : f32 to vector<16x1xf32>
    %108 = arith.subf %107, %0 : vector<16x1xf32>
    %109 = vector.broadcast %108 : vector<16x1xf32> to vector<16x16xf32>
    %110 = arith.mulf %109, %106 : vector<16x16xf32>
    %111 = vector.broadcast %0 : vector<16x1xf32> to vector<16x16xf32>
    %112 = arith.mulf %111, %104 : vector<16x16xf32>
    %113 = arith.addf %110, %112 : vector<16x16xf32>
    %c0_48 = arith.constant 0 : index
    %c0_49 = arith.constant 0 : index
    %114 = vector.load %arg8[%c0_48, %c0_49] : memref<16x128xf32, #tpu.memory_space<vmem>>, vector<16x16xf32>
    tpu.vector_store %arg8[%c0_48, %c0_49], %113 {strides = array<i32>} : memref<16x128xf32, #tpu.memory_space<vmem>>, vector<16x16xf32>,
    %c0_50 = arith.constant 0 : index
    %c0_51 = arith.constant 0 : index
    %115 = vector.load %arg8[%c0_50, %c0_51] : memref<16x128xf32, #tpu.memory_space<vmem>>, vector<16x128xf32>
    %c1_i32_52 = arith.constant 1 : i32
    %116 = tpu.dynamic_rotate %115 by %c1_i32_52 dim 1 : vector<16x128xf32>, i32 -> vector<16x128xf32>
    %117 = vector.shape_cast %21 : vector<16x1xi1> to vector<16x1xi1>
    %118 = vector.broadcast %117 : vector<16x1xi1> to vector<16x128xi1>
    %119 = arith.select %118, %116, %115 : vector<16x128xi1>, vector<16x128xf32>
    %c2_i32_53 = arith.constant 2 : i32
    %120 = tpu.dynamic_rotate %119 by %c2_i32_53 dim 1 : vector<16x128xf32>, i32 -> vector<16x128xf32>
    %121 = vector.shape_cast %25 : vector<16x1xi1> to vector<16x1xi1>
    %122 = vector.broadcast %121 : vector<16x1xi1> to vector<16x128xi1>
    %123 = arith.select %122, %120, %119 : vector<16x128xi1>, vector<16x128xf32>
    %c4_i32_54 = arith.constant 4 : i32
    %124 = tpu.dynamic_rotate %123 by %c4_i32_54 dim 1 : vector<16x128xf32>, i32 -> vector<16x128xf32>
    %125 = vector.shape_cast %29 : vector<16x1xi1> to vector<16x1xi1>
    %126 = vector.broadcast %125 : vector<16x1xi1> to vector<16x128xi1>
    %127 = arith.select %126, %124, %123 : vector<16x128xi1>, vector<16x128xf32>
    %c8_i32_55 = arith.constant 8 : i32
    %128 = tpu.dynamic_rotate %127 by %c8_i32_55 dim 1 : vector<16x128xf32>, i32 -> vector<16x128xf32>
    %129 = vector.shape_cast %33 : vector<16x1xi1> to vector<16x1xi1>
    %130 = vector.broadcast %129 : vector<16x1xi1> to vector<16x128xi1>
    %131 = arith.select %130, %128, %127 : vector<16x128xi1>, vector<16x128xf32>
    %c16_i32_56 = arith.constant 16 : i32
    %132 = tpu.dynamic_rotate %131 by %c16_i32_56 dim 1 : vector<16x128xf32>, i32 -> vector<16x128xf32>
    %133 = vector.shape_cast %37 : vector<16x1xi1> to vector<16x1xi1>
    %134 = vector.broadcast %133 : vector<16x1xi1> to vector<16x128xi1>
    %135 = arith.select %134, %132, %131 : vector<16x128xi1>, vector<16x128xf32>
    %c32_i32_57 = arith.constant 32 : i32
    %136 = tpu.dynamic_rotate %135 by %c32_i32_57 dim 1 : vector<16x128xf32>, i32 -> vector<16x128xf32>
    %137 = vector.shape_cast %41 : vector<16x1xi1> to vector<16x1xi1>
    %138 = vector.broadcast %137 : vector<16x1xi1> to vector<16x128xi1>
    %139 = arith.select %138, %136, %135 : vector<16x128xi1>, vector<16x128xf32>
    %c64_i32_58 = arith.constant 64 : i32
    %140 = tpu.dynamic_rotate %139 by %c64_i32_58 dim 1 : vector<16x128xf32>, i32 -> vector<16x128xf32>
    %141 = vector.shape_cast %45 : vector<16x1xi1> to vector<16x1xi1>
    %142 = vector.broadcast %141 : vector<16x1xi1> to vector<16x128xi1>
    %143 = arith.select %142, %140, %139 : vector<16x128xi1>, vector<16x128xf32>
    %c127_i32_59 = arith.constant 127 : i32
    %144 = tpu.dynamic_rotate %143 by %c127_i32_59 dim 1 : vector<16x128xf32>, i32 -> vector<16x128xf32>
    %cst_60 = arith.constant 0.000000e+00 : f32
    %145 = vector.broadcast %cst_60 : f32 to vector<16x128xf32>
    %146 = arith.select %12, %143, %145 : vector<16x128xi1>, vector<16x128xf32>
    %cst_61 = arith.constant 0.000000e+00 : f32
    %147 = vector.broadcast %cst_61 : f32 to vector<16x128xf32>
    %148 = arith.select %17, %144, %147 : vector<16x128xi1>, vector<16x128xf32>
    %cst_62 = arith.constant 1.000000e+00 : f32
    %149 = vector.broadcast %cst_62 : f32 to vector<16x1xf32>
    %150 = arith.subf %149, %1 : vector<16x1xf32>
    %151 = vector.broadcast %150 : vector<16x1xf32> to vector<16x128xf32>
    %152 = arith.mulf %151, %146 : vector<16x128xf32>
    %153 = vector.broadcast %1 : vector<16x1xf32> to vector<16x128xf32>
    %154 = arith.mulf %153, %148 : vector<16x128xf32>
    %155 = arith.addf %152, %154 : vector<16x128xf32>
    %156 = vector.extract_strided_slice %155 {offsets = [0, 0], sizes = [16, 16], strides = [1, 1]} : vector<16x128xf32> to vector<16x16xf32>
    %c1_63 = arith.constant 1 : index
    %c0_64 = arith.constant 0 : index
    %c0_65 = arith.constant 0 : index
    %157 = vector.load %arg7[%c1_63, %c0_64, %c0_65] : memref<4x16x16xf32, #tpu.memory_space<vmem>>, vector<1x16x16xf32>
    %158 = vector.shape_cast %157 : vector<1x16x16xf32> to vector<16x16xf32>
    %159 = vector.shape_cast %156 : vector<16x16xf32> to vector<1x16x16xf32>
    tpu.vector_store %arg7[%c1_63, %c0_64, %c0_65], %159 {strides = array<i32>} : memref<4x16x16xf32, #tpu.memory_space<vmem>>, vector<1x16x16xf32>,
    %c2 = arith.constant 2 : index
    %c0_66 = arith.constant 0 : index
    %c0_67 = arith.constant 0 : index
    %c0_68 = arith.constant 0 : index
    %160 = vector.load %arg6[%c2, %c0_66, %c0_67, %c0_68] : memref<4x2x16x16xf32, #tpu.memory_space<vmem>>, vector<1x1x16x16xf32>
    %161 = vector.shape_cast %160 : vector<1x1x16x16xf32> to vector<16x16xf32>
    %c2_69 = arith.constant 2 : index
    %c1_70 = arith.constant 1 : index
    %c0_71 = arith.constant 0 : index
    %c0_72 = arith.constant 0 : index
    %162 = vector.load %arg6[%c2_69, %c1_70, %c0_71, %c0_72] : memref<4x2x16x16xf32, #tpu.memory_space<vmem>>, vector<1x1x16x16xf32>
    %163 = vector.shape_cast %162 : vector<1x1x16x16xf32> to vector<16x16xf32>
    %cst_73 = arith.constant 1.000000e+00 : f32
    %164 = vector.broadcast %cst_73 : f32 to vector<16x1xf32>
    %165 = arith.subf %164, %0 : vector<16x1xf32>
    %166 = vector.broadcast %165 : vector<16x1xf32> to vector<16x16xf32>
    %167 = arith.mulf %166, %163 : vector<16x16xf32>
    %168 = vector.broadcast %0 : vector<16x1xf32> to vector<16x16xf32>
    %169 = arith.mulf %168, %161 : vector<16x16xf32>
    %170 = arith.addf %167, %169 : vector<16x16xf32>
    %c0_74 = arith.constant 0 : index
    %c0_75 = arith.constant 0 : index
    %171 = vector.load %arg8[%c0_74, %c0_75] : memref<16x128xf32, #tpu.memory_space<vmem>>, vector<16x16xf32>
    tpu.vector_store %arg8[%c0_74, %c0_75], %170 {strides = array<i32>} : memref<16x128xf32, #tpu.memory_space<vmem>>, vector<16x16xf32>,
    %c0_76 = arith.constant 0 : index
    %c0_77 = arith.constant 0 : index
    %172 = vector.load %arg8[%c0_76, %c0_77] : memref<16x128xf32, #tpu.memory_space<vmem>>, vector<16x128xf32>
    %c1_i32_78 = arith.constant 1 : i32
    %173 = tpu.dynamic_rotate %172 by %c1_i32_78 dim 1 : vector<16x128xf32>, i32 -> vector<16x128xf32>
    %174 = vector.shape_cast %21 : vector<16x1xi1> to vector<16x1xi1>
    %175 = vector.broadcast %174 : vector<16x1xi1> to vector<16x128xi1>
    %176 = arith.select %175, %173, %172 : vector<16x128xi1>, vector<16x128xf32>
    %c2_i32_79 = arith.constant 2 : i32
    %177 = tpu.dynamic_rotate %176 by %c2_i32_79 dim 1 : vector<16x128xf32>, i32 -> vector<16x128xf32>
    %178 = vector.shape_cast %25 : vector<16x1xi1> to vector<16x1xi1>
    %179 = vector.broadcast %178 : vector<16x1xi1> to vector<16x128xi1>
    %180 = arith.select %179, %177, %176 : vector<16x128xi1>, vector<16x128xf32>
    %c4_i32_80 = arith.constant 4 : i32
    %181 = tpu.dynamic_rotate %180 by %c4_i32_80 dim 1 : vector<16x128xf32>, i32 -> vector<16x128xf32>
    %182 = vector.shape_cast %29 : vector<16x1xi1> to vector<16x1xi1>
    %183 = vector.broadcast %182 : vector<16x1xi1> to vector<16x128xi1>
    %184 = arith.select %183, %181, %180 : vector<16x128xi1>, vector<16x128xf32>
    %c8_i32_81 = arith.constant 8 : i32
    %185 = tpu.dynamic_rotate %184 by %c8_i32_81 dim 1 : vector<16x128xf32>, i32 -> vector<16x128xf32>
    %186 = vector.shape_cast %33 : vector<16x1xi1> to vector<16x1xi1>
    %187 = vector.broadcast %186 : vector<16x1xi1> to vector<16x128xi1>
    %188 = arith.select %187, %185, %184 : vector<16x128xi1>, vector<16x128xf32>
    %c16_i32_82 = arith.constant 16 : i32
    %189 = tpu.dynamic_rotate %188 by %c16_i32_82 dim 1 : vector<16x128xf32>, i32 -> vector<16x128xf32>
    %190 = vector.shape_cast %37 : vector<16x1xi1> to vector<16x1xi1>
    %191 = vector.broadcast %190 : vector<16x1xi1> to vector<16x128xi1>
    %192 = arith.select %191, %189, %188 : vector<16x128xi1>, vector<16x128xf32>
    %c32_i32_83 = arith.constant 32 : i32
    %193 = tpu.dynamic_rotate %192 by %c32_i32_83 dim 1 : vector<16x128xf32>, i32 -> vector<16x128xf32>
    %194 = vector.shape_cast %41 : vector<16x1xi1> to vector<16x1xi1>
    %195 = vector.broadcast %194 : vector<16x1xi1> to vector<16x128xi1>
    %196 = arith.select %195, %193, %192 : vector<16x128xi1>, vector<16x128xf32>
    %c64_i32_84 = arith.constant 64 : i32
    %197 = tpu.dynamic_rotate %196 by %c64_i32_84 dim 1 : vector<16x128xf32>, i32 -> vector<16x128xf32>
    %198 = vector.shape_cast %45 : vector<16x1xi1> to vector<16x1xi1>
    %199 = vector.broadcast %198 : vector<16x1xi1> to vector<16x128xi1>
    %200 = arith.select %199, %197, %196 : vector<16x128xi1>, vector<16x128xf32>
    %c127_i32_85 = arith.constant 127 : i32
    %201 = tpu.dynamic_rotate %200 by %c127_i32_85 dim 1 : vector<16x128xf32>, i32 -> vector<16x128xf32>
    %cst_86 = arith.constant 0.000000e+00 : f32
    %202 = vector.broadcast %cst_86 : f32 to vector<16x128xf32>
    %203 = arith.select %12, %200, %202 : vector<16x128xi1>, vector<16x128xf32>
    %cst_87 = arith.constant 0.000000e+00 : f32
    %204 = vector.broadcast %cst_87 : f32 to vector<16x128xf32>
    %205 = arith.select %17, %201, %204 : vector<16x128xi1>, vector<16x128xf32>
    %cst_88 = arith.constant 1.000000e+00 : f32
    %206 = vector.broadcast %cst_88 : f32 to vector<16x1xf32>
    %207 = arith.subf %206, %1 : vector<16x1xf32>
    %208 = vector.broadcast %207 : vector<16x1xf32> to vector<16x128xf32>
    %209 = arith.mulf %208, %203 : vector<16x128xf32>
    %210 = vector.broadcast %1 : vector<16x1xf32> to vector<16x128xf32>
    %211 = arith.mulf %210, %205 : vector<16x128xf32>
    %212 = arith.addf %209, %211 : vector<16x128xf32>
    %213 = vector.extract_strided_slice %212 {offsets = [0, 0], sizes = [16, 16], strides = [1, 1]} : vector<16x128xf32> to vector<16x16xf32>
    %c2_89 = arith.constant 2 : index
    %c0_90 = arith.constant 0 : index
    %c0_91 = arith.constant 0 : index
    %214 = vector.load %arg7[%c2_89, %c0_90, %c0_91] : memref<4x16x16xf32, #tpu.memory_space<vmem>>, vector<1x16x16xf32>
    %215 = vector.shape_cast %214 : vector<1x16x16xf32> to vector<16x16xf32>
    %216 = vector.shape_cast %213 : vector<16x16xf32> to vector<1x16x16xf32>
    tpu.vector_store %arg7[%c2_89, %c0_90, %c0_91], %216 {strides = array<i32>} : memref<4x16x16xf32, #tpu.memory_space<vmem>>, vector<1x16x16xf32>,
    %c3 = arith.constant 3 : index
    %c0_92 = arith.constant 0 : index
    %c0_93 = arith.constant 0 : index
    %c0_94 = arith.constant 0 : index
    %217 = vector.load %arg6[%c3, %c0_92, %c0_93, %c0_94] : memref<4x2x16x16xf32, #tpu.memory_space<vmem>>, vector<1x1x16x16xf32>
    %218 = vector.shape_cast %217 : vector<1x1x16x16xf32> to vector<16x16xf32>
    %c3_95 = arith.constant 3 : index
    %c1_96 = arith.constant 1 : index
    %c0_97 = arith.constant 0 : index
    %c0_98 = arith.constant 0 : index
    %219 = vector.load %arg6[%c3_95, %c1_96, %c0_97, %c0_98] : memref<4x2x16x16xf32, #tpu.memory_space<vmem>>, vector<1x1x16x16xf32>
    %220 = vector.shape_cast %219 : vector<1x1x16x16xf32> to vector<16x16xf32>
    %cst_99 = arith.constant 1.000000e+00 : f32
    %221 = vector.broadcast %cst_99 : f32 to vector<16x1xf32>
    %222 = arith.subf %221, %0 : vector<16x1xf32>
    %223 = vector.broadcast %222 : vector<16x1xf32> to vector<16x16xf32>
    %224 = arith.mulf %223, %220 : vector<16x16xf32>
    %225 = vector.broadcast %0 : vector<16x1xf32> to vector<16x16xf32>
    %226 = arith.mulf %225, %218 : vector<16x16xf32>
    %227 = arith.addf %224, %226 : vector<16x16xf32>
    %c0_100 = arith.constant 0 : index
    %c0_101 = arith.constant 0 : index
    %228 = vector.load %arg8[%c0_100, %c0_101] : memref<16x128xf32, #tpu.memory_space<vmem>>, vector<16x16xf32>
    tpu.vector_store %arg8[%c0_100, %c0_101], %227 {strides = array<i32>} : memref<16x128xf32, #tpu.memory_space<vmem>>, vector<16x16xf32>,
    %c0_102 = arith.constant 0 : index
    %c0_103 = arith.constant 0 : index
    %229 = vector.load %arg8[%c0_102, %c0_103] : memref<16x128xf32, #tpu.memory_space<vmem>>, vector<16x128xf32>
    %c1_i32_104 = arith.constant 1 : i32
    %230 = tpu.dynamic_rotate %229 by %c1_i32_104 dim 1 : vector<16x128xf32>, i32 -> vector<16x128xf32>
    %231 = vector.shape_cast %21 : vector<16x1xi1> to vector<16x1xi1>
    %232 = vector.broadcast %231 : vector<16x1xi1> to vector<16x128xi1>
    %233 = arith.select %232, %230, %229 : vector<16x128xi1>, vector<16x128xf32>
    %c2_i32_105 = arith.constant 2 : i32
    %234 = tpu.dynamic_rotate %233 by %c2_i32_105 dim 1 : vector<16x128xf32>, i32 -> vector<16x128xf32>
    %235 = vector.shape_cast %25 : vector<16x1xi1> to vector<16x1xi1>
    %236 = vector.broadcast %235 : vector<16x1xi1> to vector<16x128xi1>
    %237 = arith.select %236, %234, %233 : vector<16x128xi1>, vector<16x128xf32>
    %c4_i32_106 = arith.constant 4 : i32
    %238 = tpu.dynamic_rotate %237 by %c4_i32_106 dim 1 : vector<16x128xf32>, i32 -> vector<16x128xf32>
    %239 = vector.shape_cast %29 : vector<16x1xi1> to vector<16x1xi1>
    %240 = vector.broadcast %239 : vector<16x1xi1> to vector<16x128xi1>
    %241 = arith.select %240, %238, %237 : vector<16x128xi1>, vector<16x128xf32>
    %c8_i32_107 = arith.constant 8 : i32
    %242 = tpu.dynamic_rotate %241 by %c8_i32_107 dim 1 : vector<16x128xf32>, i32 -> vector<16x128xf32>
    %243 = vector.shape_cast %33 : vector<16x1xi1> to vector<16x1xi1>
    %244 = vector.broadcast %243 : vector<16x1xi1> to vector<16x128xi1>
    %245 = arith.select %244, %242, %241 : vector<16x128xi1>, vector<16x128xf32>
    %c16_i32_108 = arith.constant 16 : i32
    %246 = tpu.dynamic_rotate %245 by %c16_i32_108 dim 1 : vector<16x128xf32>, i32 -> vector<16x128xf32>
    %247 = vector.shape_cast %37 : vector<16x1xi1> to vector<16x1xi1>
    %248 = vector.broadcast %247 : vector<16x1xi1> to vector<16x128xi1>
    %249 = arith.select %248, %246, %245 : vector<16x128xi1>, vector<16x128xf32>
    %c32_i32_109 = arith.constant 32 : i32
    %250 = tpu.dynamic_rotate %249 by %c32_i32_109 dim 1 : vector<16x128xf32>, i32 -> vector<16x128xf32>
    %251 = vector.shape_cast %41 : vector<16x1xi1> to vector<16x1xi1>
    %252 = vector.broadcast %251 : vector<16x1xi1> to vector<16x128xi1>
    %253 = arith.select %252, %250, %249 : vector<16x128xi1>, vector<16x128xf32>
    %c64_i32_110 = arith.constant 64 : i32
    %254 = tpu.dynamic_rotate %253 by %c64_i32_110 dim 1 : vector<16x128xf32>, i32 -> vector<16x128xf32>
    %255 = vector.shape_cast %45 : vector<16x1xi1> to vector<16x1xi1>
    %256 = vector.broadcast %255 : vector<16x1xi1> to vector<16x128xi1>
    %257 = arith.select %256, %254, %253 : vector<16x128xi1>, vector<16x128xf32>
    %c127_i32_111 = arith.constant 127 : i32
    %258 = tpu.dynamic_rotate %257 by %c127_i32_111 dim 1 : vector<16x128xf32>, i32 -> vector<16x128xf32>
    %cst_112 = arith.constant 0.000000e+00 : f32
    %259 = vector.broadcast %cst_112 : f32 to vector<16x128xf32>
    %260 = arith.select %12, %257, %259 : vector<16x128xi1>, vector<16x128xf32>
    %cst_113 = arith.constant 0.000000e+00 : f32
    %261 = vector.broadcast %cst_113 : f32 to vector<16x128xf32>
    %262 = arith.select %17, %258, %261 : vector<16x128xi1>, vector<16x128xf32>
    %cst_114 = arith.constant 1.000000e+00 : f32
    %263 = vector.broadcast %cst_114 : f32 to vector<16x1xf32>
    %264 = arith.subf %263, %1 : vector<16x1xf32>
    %265 = vector.broadcast %264 : vector<16x1xf32> to vector<16x128xf32>
    %266 = arith.mulf %265, %260 : vector<16x128xf32>
    %267 = vector.broadcast %1 : vector<16x1xf32> to vector<16x128xf32>
    %268 = arith.mulf %267, %262 : vector<16x128xf32>
    %269 = arith.addf %266, %268 : vector<16x128xf32>
    %270 = vector.extract_strided_slice %269 {offsets = [0, 0], sizes = [16, 16], strides = [1, 1]} : vector<16x128xf32> to vector<16x16xf32>
    %c3_115 = arith.constant 3 : index
    %c0_116 = arith.constant 0 : index
    %c0_117 = arith.constant 0 : index
    %271 = vector.load %arg7[%c3_115, %c0_116, %c0_117] : memref<4x16x16xf32, #tpu.memory_space<vmem>>, vector<1x16x16xf32>
    %272 = vector.shape_cast %271 : vector<1x16x16xf32> to vector<16x16xf32>
    %273 = vector.shape_cast %270 : vector<16x16xf32> to vector<1x16x16xf32>
    tpu.vector_store %arg7[%c3_115, %c0_116, %c0_117], %273 {strides = array<i32>} : memref<4x16x16xf32, #tpu.memory_space<vmem>>, vector<1x16x16xf32>,
    return
  }
  func.func @transform_0(%arg0: i32, %arg1: i32) -> (i32, i32) {
    %c0_i32 = arith.constant 0 : i32
    %c0_i32_0 = arith.constant 0 : i32
    return %arg1, %c0_i32 : i32, i32
  }
  func.func @transform_1(%arg0: i32, %arg1: i32) -> (i32, i32) {
    %c0_i32 = arith.constant 0 : i32
    %c0_i32_0 = arith.constant 0 : i32
    return %arg1, %c0_i32 : i32, i32
  }
  func.func @transform_2(%arg0: i32, %arg1: i32) -> (i32, i32) {
    %c0_i32 = arith.constant 0 : i32
    %c0_i32_0 = arith.constant 0 : i32
    return %arg1, %c0_i32 : i32, i32
  }
  func.func @transform_3(%arg0: i32, %arg1: i32) -> (i32, i32) {
    %c0_i32 = arith.constant 0 : i32
    %c0_i32_0 = arith.constant 0 : i32
    return %arg1, %c0_i32 : i32, i32
  }
  func.func @transform_4(%arg0: i32, %arg1: i32) -> (i32, i32, i32, i32) {
    %c0_i32 = arith.constant 0 : i32
    %c0_i32_0 = arith.constant 0 : i32
    %c0_i32_1 = arith.constant 0 : i32
    return %arg0, %c0_i32, %arg1, %c0_i32_0 : i32, i32, i32, i32
  }
  func.func @transform_5(%arg0: i32, %arg1: i32) -> (i32, i32, i32) {
    %c0_i32 = arith.constant 0 : i32
    %c0_i32_0 = arith.constant 0 : i32
    return %arg0, %arg1, %c0_i32 : i32, i32, i32
  }
}

</mosaic_0001>

<llo_original>
// kernel: tpu_custom_call.1
$region0: #{tpu_custom_call.1}
  #allocation0 [shape = 'u32[]', space=smem, size = 0x4, offset = 0x4, fixed_abs, tag = 'smem constant byte address 0x4 - core index']
  #allocation1 [shape = 'u32[144,128]{1,0:T(1,128)}', space=vmem, size = 0x12000, scoped, tag = 'internal scratch']
  #allocation2 [shape = 'f32[16,128]{1,0:T(8,128)}', space=vmem, size = 0x2000, scoped, tag = 'scratch operand']
  %s0 = inlined_call_operand.vmem [shape: f32[16,1], index: 0, kind: input, shape index: {}]
  %s1 = inlined_call_operand.vmem [shape: f32[16,1], index: 1, kind: input, shape index: {}]
  %s2 = inlined_call_operand.vmem [shape: s32[16,1], index: 2, kind: input, shape index: {}]
  %s3 = inlined_call_operand.vmem [shape: s32[16,1], index: 3, kind: input, shape index: {}]
  %s4 = inlined_call_operand.hbm [shape: f32[8,2,16,16], index: 4, kind: input, shape index: {}]
  %s5 = inlined_call_operand.hbm [shape: f32[8,16,16], index: 5, kind: output, shape index: {}]
  %s6 = sld [smem:[#allocation0]]
  $region57: #{tpu_custom_call.1} parent=0
    _
  %s8 = ssub.s32 1, %s6
  %s9 = scalar_select 0, %s8, %s6
  $region1: #{tpu_custom_call.1} parent=0
    #allocation3 [shape = 'u8[131072]{0}', space=vmem, size = 0x20000, scoped, tag = 'input window, operand 4']
    #allocation4 [shape = 's32[2]{0}', space=sflag, size = 0x8, scoped, tag = 'scoped memory for tpu_custom_call.1']
    #allocation5 [shape = 's32[2]{0}', space=sflag, size = 0x8, scoped, tag = 'scoped memory for tpu_custom_call.1']
    #allocation6 [shape = 'u8[65536]{0}', space=vmem, size = 0x10000, scoped, tag = 'output window, operand 0']
    %10 = vsyncpa [#allocation4], 0
    %s11 = scalar_lea.sflag [#allocation4], 1
    %12 = vsyncpa %s11, 0
    %13 = vsyncpa [#allocation5], 0
    %s14 = scalar_lea.sflag [#allocation5], 1
    %15 = vsyncpa %s14, 0
    loop: start=0, step=1, limit=4
    $region2: #{tpu_custom_call.1} parent=1 // loop_pre_header
      _
    $region3: #{tpu_custom_call.1} parent=1 // loop_header
      %s17 = sphi 0, %s21
      %p18 = scmp.ge.s32.totalorder %s17, 4
      %s24 = sphi 0, %s36
      %s25 = sphi 0, %s32
      %s26 = sphi 0, %s24
      %s27 = sphi 0, %s25
      %s28 = sphi 0, %s26
      %s29 = sphi 0, %s27
      %s39 = sphi 0, %s41
      %s42 = sphi 0, %s39
      %s43 = sphi 0, %s42
      %s59 = sphi 0, %s43
      %s65 = sphi 0, %s67
      %s68 = sphi 0, %s65
      %s69 = sphi 0, %s68
      %s85 = sphi 0, %s69
      %s91 = sphi 0, %s93
      %s94 = sphi 0, %s91
      %s95 = sphi 0, %s94
      %s111 = sphi 0, %s95
      %s117 = sphi 0, %s119
      %s120 = sphi 0, %s117
      %s121 = sphi 0, %s120
      %s137 = sphi 0, %s121
      %s145 = sphi 0, %s147
      %s148 = sphi 0, %s145
      %s149 = sphi 0, %s148
      %s165 = sphi 0, %s149
      %s173 = sphi 0, %s175
      %s176 = sphi 0, %s173
      %s177 = sphi 0, %s176
      %s193 = sphi 0, %s177
    $region4: #{tpu_custom_call.1} parent=1 // loop_header_branch
      %20 = sbr.rel (%p18) target = $region8
    $region5: #{tpu_custom_call.1} parent=1 // loop_body
      %s22 = ssub.s32 %s17, 1
      %s23 = ssub.s32 %s17, 2
      %s30 = sadd.s32 1, %s25
      %p31 = scmp.ge.s32.totalorder %s30, 1
      %s32 = scalar_select %p31, 0, %s30
      %s33 = sadd.s32 1, %s24
      %s34 = scalar_select %p31, %s33, %s24
      %p35 = scmp.ge.s32.totalorder %s34, 2
      %s36 = scalar_select %p35, 0, %s34
      %s37 = ssub.s32 %s25, %s32
      %p38 = scmp.eq.s32.totalorder %s37, 0
      %s40 = sadd.s32 %s39, 1
      %s41 = scalar_select %p38, %s39, %s40
      %p44 = pneg %p38
      %p45 = scmp.eq.s32.totalorder %s17, 1
      %p46 = por %p44, %p45
      %p47 = scmp.ne.s32.totalorder %s39, %s42
      %p48 = scmp.eq.s32.totalorder %s17, 0
      %p49 = por %p47, %p48
      %p50 = scmp.ne.s32.totalorder %s39, %s42
      %p51 = scmp.eq.s32.totalorder %s22, 1
      %p52 = por %p50, %p51
      %p53 = scmp.ne.s32.totalorder %s42, %s43
      %p54 = scmp.eq.s32.totalorder %s22, 0
      %p55 = por %p53, %p54
      %p56 = scmp.ne.s32.totalorder %s42, %s43
      %p57 = scmp.eq.s32.totalorder %s23, 1
      %p58 = por %p56, %p57
      %p60 = scmp.ne.s32.totalorder %s43, %s59
      %p61 = scmp.eq.s32.totalorder %s23, 0
      %p62 = por %p60, %p61
      %s63 = ssub.s32 %s25, %s32
      %p64 = scmp.eq.s32.totalorder %s63, 0
      %s66 = sadd.s32 %s65, 1
      %s67 = scalar_select %p64, %s65, %s66
      %p70 = pneg %p64
      %p71 = scmp.eq.s32.totalorder %s17, 1
      %p72 = por %p70, %p71
      %p73 = scmp.ne.s32.totalorder %s65, %s68
      %p74 = scmp.eq.s32.totalorder %s17, 0
      %p75 = por %p73, %p74
      %p76 = scmp.ne.s32.totalorder %s65, %s68
      %p77 = scmp.eq.s32.totalorder %s22, 1
      %p78 = por %p76, %p77
      %p79 = scmp.ne.s32.totalorder %s68, %s69
      %p80 = scmp.eq.s32.totalorder %s22, 0
      %p81 = por %p79, %p80
      %p82 = scmp.ne.s32.totalorder %s68, %s69
      %p83 = scmp.eq.s32.totalorder %s23, 1
      %p84 = por %p82, %p83
      %p86 = scmp.ne.s32.totalorder %s69, %s85
      %p87 = scmp.eq.s32.totalorder %s23, 0
      %p88 = por %p86, %p87
      %s89 = ssub.s32 %s25, %s32
      %p90 = scmp.eq.s32.totalorder %s89, 0
      %s92 = sadd.s32 %s91, 1
      %s93 = scalar_select %p90, %s91, %s92
      %p96 = pneg %p90
      %p97 = scmp.eq.s32.totalorder %s17, 1
      %p98 = por %p96, %p97
      %p99 = scmp.ne.s32.totalorder %s91, %s94
      %p100 = scmp.eq.s32.totalorder %s17, 0
      %p101 = por %p99, %p100
      %p102 = scmp.ne.s32.totalorder %s91, %s94
      %p103 = scmp.eq.s32.totalorder %s22, 1
      %p104 = por %p102, %p103
      %p105 = scmp.ne.s32.totalorder %s94, %s95
      %p106 = scmp.eq.s32.totalorder %s22, 0
      %p107 = por %p105, %p106
      %p108 = scmp.ne.s32.totalorder %s94, %s95
      %p109 = scmp.eq.s32.totalorder %s23, 1
      %p110 = por %p108, %p109
      %p112 = scmp.ne.s32.totalorder %s95, %s111
      %p113 = scmp.eq.s32.totalorder %s23, 0
      %p114 = por %p112, %p113
      %s115 = ssub.s32 %s25, %s32
      %p116 = scmp.eq.s32.totalorder %s115, 0
      %s118 = sadd.s32 %s117, 1
      %s119 = scalar_select %p116, %s117, %s118
      %p122 = pneg %p116
      %p123 = scmp.eq.s32.totalorder %s17, 1
      %p124 = por %p122, %p123
      %p125 = scmp.ne.s32.totalorder %s117, %s120
      %p126 = scmp.eq.s32.totalorder %s17, 0
      %p127 = por %p125, %p126
      %p128 = scmp.ne.s32.totalorder %s117, %s120
      %p129 = scmp.eq.s32.totalorder %s22, 1
      %p130 = por %p128, %p129
      %p131 = scmp.ne.s32.totalorder %s120, %s121
      %p132 = scmp.eq.s32.totalorder %s22, 0
      %p133 = por %p131, %p132
      %p134 = scmp.ne.s32.totalorder %s120, %s121
      %p135 = scmp.eq.s32.totalorder %s23, 1
      %p136 = por %p134, %p135
      %p138 = scmp.ne.s32.totalorder %s121, %s137
      %p139 = scmp.eq.s32.totalorder %s23, 0
      %p140 = por %p138, %p139
      %s141 = ssub.s32 %s24, %s36
      %s142 = ssub.s32 %s25, %s32
      %s143 = sor.u32 %s141, %s142
      %p144 = scmp.eq.s32.totalorder %s143, 0
      %s146 = sadd.s32 %s145, 1
      %s147 = scalar_select %p144, %s145, %s146
      %p150 = pneg %p144
      %p151 = scmp.eq.s32.totalorder %s17, 1
      %p152 = por %p150, %p151
      %p153 = scmp.ne.s32.totalorder %s145, %s148
      %p154 = scmp.eq.s32.totalorder %s17, 0
      %p155 = por %p153, %p154
      %p156 = scmp.ne.s32.totalorder %s145, %s148
      %p157 = scmp.eq.s32.totalorder %s22, 1
      %p158 = por %p156, %p157
      %p159 = scmp.ne.s32.totalorder %s148, %s149
      %p160 = scmp.eq.s32.totalorder %s22, 0
      %p161 = por %p159, %p160
      %p162 = scmp.ne.s32.totalorder %s148, %s149
      %p163 = scmp.eq.s32.totalorder %s23, 1
      %p164 = por %p162, %p163
      %p166 = scmp.ne.s32.totalorder %s149, %s165
      %p167 = scmp.eq.s32.totalorder %s23, 0
      %p168 = por %p166, %p167
      %s169 = ssub.s32 %s24, %s36
      %s170 = ssub.s32 %s25, %s32
      %s171 = sor.u32 %s169, %s170
      %p172 = scmp.eq.s32.totalorder %s171, 0
      %s174 = sadd.s32 %s173, 1
      %s175 = scalar_select %p172, %s173, %s174
      %p178 = pneg %p172
      %p179 = scmp.eq.s32.totalorder %s17, 1
      %p180 = por %p178, %p179
      %p181 = scmp.ne.s32.totalorder %s173, %s176
      %p182 = scmp.eq.s32.totalorder %s17, 0
      %p183 = por %p181, %p182
      %p184 = scmp.ne.s32.totalorder %s173, %s176
      %p185 = scmp.eq.s32.totalorder %s22, 1
      %p186 = por %p184, %p185
      %p187 = scmp.ne.s32.totalorder %s176, %s177
      %p188 = scmp.eq.s32.totalorder %s22, 0
      %p189 = por %p187, %p188
      %p190 = scmp.ne.s32.totalorder %s176, %s177
      %p191 = scmp.eq.s32.totalorder %s23, 1
      %p192 = por %p190, %p191
      %p194 = scmp.ne.s32.totalorder %s177, %s193
      %p195 = scmp.eq.s32.totalorder %s23, 0
      %p196 = por %p194, %p195
      %p197 = scmp.le.s32.totalorder 1, %s17
      %p198 = scmp.lt.s32.totalorder %s17, 3
      %p199 = pnand %p197, %p198
      %p200 = pneg %p199
      // Predicated region
      $region9: #{tpu_custom_call.1} parent=5 // pred_check
        _
      $region10: #{tpu_custom_call.1} parent=5 // pred_check_branch
        %202 = sbr.rel (%p199) target = $region12
      $region11: #{tpu_custom_call.1} parent=5 // pred_region
        %s203 = ssub.s32 %s17, 1
        // Predicated region
        $region13: #{tpu_custom_call.1} parent=11 // pred_check
          %p204 = pneg %p55
        $region14: #{tpu_custom_call.1} parent=11 // pred_check_branch
          %206 = sbr.rel (%p204) target = $region16
        $region15: #{tpu_custom_call.1} parent=11 // pred_region
          %s207 = smul.u32 2, %s27
          %p208 = scmp.lt.s32.totalorder %s207, 1
          %s209 = scalar_select %p208, %s207, 1
          %s210 = smul.addr %s209, 8
          %s211 = scalar_lea.vmem %s0, %s210
          %s212 = smul.u32 2, %s27
        $region16: #{tpu_custom_call.1} parent=11 // pred_fallthru
          _
        // Predicated region
        $region17: #{tpu_custom_call.1} parent=11 // pred_check
          %p213 = pneg %p81
        $region18: #{tpu_custom_call.1} parent=11 // pred_check_branch
          %215 = sbr.rel (%p213) target = $region20
        $region19: #{tpu_custom_call.1} parent=11 // pred_region
          %s216 = smul.u32 2, %s27
          %p217 = scmp.lt.s32.totalorder %s216, 1
          %s218 = scalar_select %p217, %s216, 1
          %s219 = smul.addr %s218, 8
          %s220 = scalar_lea.vmem %s1, %s219
          %s221 = smul.u32 2, %s27
        $region20: #{tpu_custom_call.1} parent=11 // pred_fallthru
          _
        // Predicated region
        $region21: #{tpu_custom_call.1} parent=11 // pred_check
          %p222 = pneg %p107
        $region22: #{tpu_custom_call.1} parent=11 // pred_check_branch
          %224 = sbr.rel (%p222) target = $region24
        $region23: #{tpu_custom_call.1} parent=11 // pred_region
          %s225 = smul.u32 2, %s27
          %p226 = scmp.lt.s32.totalorder %s225, 1
          %s227 = scalar_select %p226, %s225, 1
          %s228 = smul.addr %s227, 8
          %s229 = scalar_lea.vmem %s2, %s228
          %s230 = smul.u32 2, %s27
        $region24: #{tpu_custom_call.1} parent=11 // pred_fallthru
          _
        // Predicated region
        $region25: #{tpu_custom_call.1} parent=11 // pred_check
          %p231 = pneg %p133
        $region26: #{tpu_custom_call.1} parent=11 // pred_check_branch
          %233 = sbr.rel (%p231) target = $region28
        $region27: #{tpu_custom_call.1} parent=11 // pred_region
          %s234 = smul.u32 2, %s27
          %p235 = scmp.lt.s32.totalorder %s234, 1
          %s236 = scalar_select %p235, %s234, 1
          %s237 = smul.addr %s236, 8
          %s238 = scalar_lea.vmem %s3, %s237
          %s239 = smul.u32 2, %s27
        $region28: #{tpu_custom_call.1} parent=11 // pred_fallthru
          _
      $region12: #{tpu_custom_call.1} parent=5 // pred_fallthru
        _
      %p240 = scmp.lt.s32.totalorder %s17, 2
      // Predicated region
      $region29: #{tpu_custom_call.1} parent=5 // pred_check
        %p241 = pneg %p240
      $region30: #{tpu_custom_call.1} parent=5 // pred_check_branch
        %243 = sbr.rel (%p241) target = $region32
      $region31: #{tpu_custom_call.1} parent=5 // pred_region
        // Predicated region
        $region33: #{tpu_custom_call.1} parent=31 // pred_check
          %p244 = pneg %p155
        $region34: #{tpu_custom_call.1} parent=31 // pred_check_branch
          %246 = sbr.rel (%p244) target = $region36
        $region35: #{tpu_custom_call.1} parent=31 // pred_region
          %s247 = sand.u32 %s145, 1
          %s248 = scalar_lea.sflag [#allocation4], %s247
          %s249 = sand.u32 %s145, 1
          %s250 = smul.addr %s249, 128
          %s251 = scalar_lea.vmem [#allocation3], %s250
          %s252 = smul.u32 4, %s24
          %s253 = smul.u32 2, %s25
          %s255 = ssub.s32 2048, 2048
          %256 = vsyncadd %s248, %s255
          %s257 = smul.addr %s252, 4
          %s258 = sadd.s32 %s253, %s257
          %s259 = smul.addr %s258, 128
          %s260 = scalar_lea.hbm %s4, %s259
          %s261 = sshll.u32 %s251, 4
          %s262 = int_to_ptr.vmem [resolvable:$true] %s261
          %267 = dma.hbm_to_vmem [thread:$0]  %s260, 2048, %s262, %s248, 128, 128, 8
        $region36: #{tpu_custom_call.1} parent=31 // pred_fallthru
          _
      $region32: #{tpu_custom_call.1} parent=5 // pred_fallthru
        _
      %p268 = scmp.le.s32.totalorder 1, %s17
      %p269 = scmp.lt.s32.totalorder %s17, 3
      %p270 = pnand %p268, %p269
      %p271 = pneg %p270
      // Predicated region
      $region37: #{tpu_custom_call.1} parent=5 // pred_check
        _
      $region38: #{tpu_custom_call.1} parent=5 // pred_check_branch
        %273 = sbr.rel (%p270) target = $region40
      $region39: #{tpu_custom_call.1} parent=5 // pred_region
        %s274 = ssub.s32 %s17, 1
        %s275 = sand.u32 %s148, 1
        %s276 = scalar_lea.sflag [#allocation4], %s275
        %s277 = sand.u32 %s148, 1
        %s278 = smul.addr %s277, 128
        %s279 = scalar_lea.vmem [#allocation3], %s278
        // Predicated region
        $region41: #{tpu_custom_call.1} parent=39 // pred_check
          %p280 = pneg %p161
        $region42: #{tpu_custom_call.1} parent=39 // pred_check_branch
          %282 = sbr.rel (%p280) target = $region44
        $region43: #{tpu_custom_call.1} parent=39 // pred_region
          %283 = dma.done %s276, 2048
        $region44: #{tpu_custom_call.1} parent=39 // pred_fallthru
          _
        %s284 = smul.u32 2, %s27
        %p285 = scmp.lt.s32.totalorder %s284, 1
        %s286 = scalar_select %p285, %s284, 1
        %s287 = smul.addr %s286, 8
        %s288 = scalar_lea.vmem %s0, %s287
        %p289 = pneg %p55
        %p290 = pneg %p52
        %s291 = smul.u32 2, %s27
        %p292 = scmp.lt.s32.totalorder %s291, 1
        %s293 = scalar_select %p292, %s291, 1
        %s294 = smul.addr %s293, 8
        %s295 = scalar_lea.vmem %s1, %s294
        %p296 = pneg %p81
        %p297 = pneg %p78
        %s298 = smul.u32 2, %s27
        %p299 = scmp.lt.s32.totalorder %s298, 1
        %s300 = scalar_select %p299, %s298, 1
        %s301 = smul.addr %s300, 8
        %s302 = scalar_lea.vmem %s2, %s301
        %p303 = pneg %p107
        %p304 = pneg %p104
        %s305 = smul.u32 2, %s27
        %p306 = scmp.lt.s32.totalorder %s305, 1
        %s307 = scalar_select %p306, %s305, 1
        %s308 = smul.addr %s307, 8
        %s309 = scalar_lea.vmem %s3, %s308
        %p310 = pneg %p133
        %p311 = pneg %p130
        %s312 = sand.u32 %s148, 1
        %s313 = scalar_lea.sflag [#allocation4], %s312
        %s314 = sand.u32 %s148, 1
        %s315 = smul.addr %s314, 128
        %s316 = scalar_lea.vmem [#allocation3], %s315
        %p317 = pneg %p161
        %p318 = pneg %p158
        %p319 = pneg %p189
        %p320 = pneg %p186
        %s321 = sand.u32 %s176, 1
        %s322 = scalar_lea.sflag [#allocation5], %s321
        %s323 = sand.u32 %s176, 1
        %s324 = smul.addr %s323, 64
        %s325 = scalar_lea.vmem [#allocation6], %s324
        %s326 = smul.u32 2, %s27
        %p327 = scmp.lt.s32.totalorder %s326, 1
        %s328 = scalar_select %p327, %s326, 1
        %s329 = smul.addr %s328, 8
        %s330 = scalar_lea.vmem %s0, %s329
        %s331 = smul.u32 2, %s27
        %s332 = smul.u32 2, %s27
        %p333 = scmp.lt.s32.totalorder %s332, 1
        %s334 = scalar_select %p333, %s332, 1
        %s335 = smul.addr %s334, 8
        %s336 = scalar_lea.vmem %s1, %s335
        %s337 = smul.u32 2, %s27
        %s338 = smul.u32 2, %s27
        %p339 = scmp.lt.s32.totalorder %s338, 1
        %s340 = scalar_select %p339, %s338, 1
        %s341 = smul.addr %s340, 8
        %s342 = scalar_lea.vmem %s2, %s341
        %s343 = smul.u32 2, %s27
        %s344 = smul.u32 2, %s27
        %p345 = scmp.lt.s32.totalorder %s344, 1
        %s346 = scalar_select %p345, %s344, 1
        %s347 = smul.addr %s346, 8
        %s348 = scalar_lea.vmem %s3, %s347
        %s349 = smul.u32 2, %s27
        %s350 = smul.u32 4, %s26
        %s351 = smul.u32 2, %s27
        %s352 = smul.u32 4, %s26
        %s353 = smul.u32 2, %s27
        %v354 = vld [vmem:[%s330] sm:$0xff]
        %v355 = vld [vmem:[%s330 + $0x8] sm:$0xff]
        %v356 = vld [vmem:[%s336] sm:$0xff]
        %v357 = vld [vmem:[%s336 + $0x8] sm:$0xff]
        %v358 = vld [vmem:[%s342] sm:$0xff]
        %v359 = vld [vmem:[%s342 + $0x8] sm:$0xff]
        %v360 = vld [vmem:[%s348] sm:$0xff]
        %v361 = vld [vmem:[%s348 + $0x8] sm:$0xff]
        %v362 = vlaneseq
        %v363 = vand.u32 %v362, 127
        %364 = vset.pattern.permute.xlu0 0
        %365 = vperm.xlu0 %364, %v358
        %v366 = vpop.permute.xlu0 %365
        %367 = vset.pattern.permute.xlu0 0
        %368 = vperm.xlu0 %367, %v359
        %v369 = vpop.permute.xlu0 %368
        %v370 = vadd.s32 %v363, %v366
        %v371 = vadd.s32 %v363, %v369
        %vm372 = vcmp.ge.s32.totalorder %v370, 0
        %vm373 = vcmp.ge.s32.totalorder %v371, 0
        %vm374 = vcmp.lt.s32.totalorder %v370, 16
        %vm375 = vcmp.lt.s32.totalorder %v371, 16
        %vm376 = vmand %vm372, %vm374
        %vm377 = vmand %vm373, %vm375
        %vm378 = vcmp.ge.s32.totalorder %v370, 4294967295
        %vm379 = vcmp.ge.s32.totalorder %v371, 4294967295
        %vm380 = vcmp.lt.s32.totalorder %v370, 15
        %vm381 = vcmp.lt.s32.totalorder %v371, 15
        %vm382 = vmand %vm378, %vm380
        %vm383 = vmand %vm379, %vm381
        %v384 = vand.u32 %v360, 1
        %v385 = vand.u32 %v361, 1
        %vm386 = vcmp.ne.s32.totalorder %v384, 0
        %vm387 = vcmp.ne.s32.totalorder %v385, 0
        %v388 = vand.u32 %v360, 2
        %v389 = vand.u32 %v361, 2
        %vm390 = vcmp.ne.s32.totalorder %v388, 0
        %vm391 = vcmp.ne.s32.totalorder %v389, 0
        %v392 = vand.u32 %v360, 4
        %v393 = vand.u32 %v361, 4
        %vm394 = vcmp.ne.s32.totalorder %v392, 0
        %vm395 = vcmp.ne.s32.totalorder %v393, 0
        %v396 = vand.u32 %v360, 8
        %v397 = vand.u32 %v361, 8
        %vm398 = vcmp.ne.s32.totalorder %v396, 0
        %vm399 = vcmp.ne.s32.totalorder %v397, 0
        %v400 = vand.u32 %v360, 16
        %v401 = vand.u32 %v361, 16
        %vm402 = vcmp.ne.s32.totalorder %v400, 0
        %vm403 = vcmp.ne.s32.totalorder %v401, 0
        %v404 = vand.u32 %v360, 32
        %v405 = vand.u32 %v361, 32
        %vm406 = vcmp.ne.s32.totalorder %v404, 0
        %vm407 = vcmp.ne.s32.totalorder %v405, 0
        %v408 = vand.u32 %v360, 64
        %v409 = vand.u32 %v361, 64
        %vm410 = vcmp.ne.s32.totalorder %v408, 0
        %vm411 = vcmp.ne.s32.totalorder %v409, 0
        %v412 = vld [vmem:[%s279] sm:$0xff]
        %v413 = vld [vmem:[%s279 + $0x8] sm:$0xff]
        %s414 = scalar_lea.vmem %s279, 16 [#allocation3]
        %v415 = vld [vmem:[%s414] sm:$0xff]
        %v416 = vld [vmem:[%s414 + $0x8] sm:$0xff]
        %v417 = vsub.f32 1.0, %v354
        %v418 = vsub.f32 1.0, %v355
        %420 = vset.pattern.permute.xlu0 0
        %421 = vperm.xlu0 %420, %v417
        %v422 = vpop.permute.xlu0 %421
        %425 = vset.pattern.permute.xlu0 0
        %426 = vperm.xlu0 %425, %v418
        %v427 = vpop.permute.xlu0 %426
        %v429 = vmul.f32 %v422, %v415
        %v430 = vmul.f32 %v427, %v416
        %432 = vset.pattern.permute.xlu0 0
        %433 = vperm.xlu0 %432, %v354
        %v434 = vpop.permute.xlu0 %433
        %437 = vset.pattern.permute.xlu0 0
        %438 = vperm.xlu0 %437, %v355
        %v439 = vpop.permute.xlu0 %438
        %v441 = vmul.f32 %v434, %v412
        %v442 = vmul.f32 %v439, %v413
        %v443 = vadd.f32 %v429, %v441
        %v444 = vadd.f32 %v430, %v442
        %vm445 = vcmask 130048
        %446 = vst.msk [vmem:[#allocation2] sm:$0xff] %vm445, %v443
        %447 = vst.msk [vmem:[#allocation2 + $0x8] sm:$0xff] %vm445, %v444
        %v448 = vld [vmem:[#allocation2] sm:$0xff]
        %v449 = vld [vmem:[#allocation2 + $0x8] sm:$0xff]
        %450 = vrot.lane.b32.xlu0 %v448, 1
        %v451 = vpop.permute.xlu0 %450
        %452 = vrot.lane.b32.xlu0 %v449, 1
        %v453 = vpop.permute.xlu0 %452
        %v454 = vsel %vm386, 1, 0
        %v455 = vsel %vm387, 1, 0
        %456 = vset.pattern.permute.xlu0 0
        %457 = vperm.xlu0 %456, %v454
        %v458 = vpop.permute.xlu0 %457
        %459 = vset.pattern.permute.xlu0 0
        %460 = vperm.xlu0 %459, %v455
        %v461 = vpop.permute.xlu0 %460
        %vm462 = vcmp.eq.s32.totalorder %v458, 1
        %vm463 = vcmp.eq.s32.totalorder %v461, 1
        %v464 = vsel %vm462, %v451, %v448
        %v465 = vsel %vm463, %v453, %v449
        %466 = vrot.lane.b32.xlu0 %v464, 2
        %v467 = vpop.permute.xlu0 %466
        %468 = vrot.lane.b32.xlu0 %v465, 2
        %v469 = vpop.permute.xlu0 %468
        %v470 = vsel %vm390, 1, 0
        %v471 = vsel %vm391, 1, 0
        %472 = vset.pattern.permute.xlu0 0
        %473 = vperm.xlu0 %472, %v470
        %v474 = vpop.permute.xlu0 %473
        %475 = vset.pattern.permute.xlu0 0
        %476 = vperm.xlu0 %475, %v471
        %v477 = vpop.permute.xlu0 %476
        %vm478 = vcmp.eq.s32.totalorder %v474, 1
        %vm479 = vcmp.eq.s32.totalorder %v477, 1
        %v480 = vsel %vm478, %v467, %v464
        %v481 = vsel %vm479, %v469, %v465
        %482 = vrot.lane.b32.xlu0 %v480, 4
        %v483 = vpop.permute.xlu0 %482
        %484 = vrot.lane.b32.xlu0 %v481, 4
        %v485 = vpop.permute.xlu0 %484
        %v486 = vsel %vm394, 1, 0
        %v487 = vsel %vm395, 1, 0
        %488 = vset.pattern.permute.xlu0 0
        %489 = vperm.xlu0 %488, %v486
        %v490 = vpop.permute.xlu0 %489
        %491 = vset.pattern.permute.xlu0 0
        %492 = vperm.xlu0 %491, %v487
        %v493 = vpop.permute.xlu0 %492
        %vm494 = vcmp.eq.s32.totalorder %v490, 1
        %vm495 = vcmp.eq.s32.totalorder %v493, 1
        %v496 = vsel %vm494, %v483, %v480
        %v497 = vsel %vm495, %v485, %v481
        %498 = vrot.lane.b32.xlu0 %v496, 8
        %v499 = vpop.permute.xlu0 %498
        %500 = vrot.lane.b32.xlu0 %v497, 8
        %v501 = vpop.permute.xlu0 %500
        %v502 = vsel %vm398, 1, 0
        %v503 = vsel %vm399, 1, 0
        %504 = vset.pattern.permute.xlu0 0
        %505 = vperm.xlu0 %504, %v502
        %v506 = vpop.permute.xlu0 %505
        %507 = vset.pattern.permute.xlu0 0
        %508 = vperm.xlu0 %507, %v503
        %v509 = vpop.permute.xlu0 %508
        %vm510 = vcmp.eq.s32.totalorder %v506, 1
        %vm511 = vcmp.eq.s32.totalorder %v509, 1
        %v512 = vsel %vm510, %v499, %v496
        %v513 = vsel %vm511, %v501, %v497
        %514 = vrot.lane.b32.xlu0 %v512, 16
        %v515 = vpop.permute.xlu0 %514
        %516 = vrot.lane.b32.xlu0 %v513, 16
        %v517 = vpop.permute.xlu0 %516
        %v518 = vsel %vm402, 1, 0
        %v519 = vsel %vm403, 1, 0
        %520 = vset.pattern.permute.xlu0 0
        %521 = vperm.xlu0 %520, %v518
        %v522 = vpop.permute.xlu0 %521
        %523 = vset.pattern.permute.xlu0 0
        %524 = vperm.xlu0 %523, %v519
        %v525 = vpop.permute.xlu0 %524
        %vm526 = vcmp.eq.s32.totalorder %v522, 1
        %vm527 = vcmp.eq.s32.totalorder %v525, 1
        %v528 = vsel %vm526, %v515, %v512
        %v529 = vsel %vm527, %v517, %v513
        %530 = vrot.lane.b32.xlu0 %v528, 32
        %v531 = vpop.permute.xlu0 %530
        %532 = vrot.lane.b32.xlu0 %v529, 32
        %v533 = vpop.permute.xlu0 %532
        %v534 = vsel %vm406, 1, 0
        %v535 = vsel %vm407, 1, 0
        %536 = vset.pattern.permute.xlu0 0
        %537 = vperm.xlu0 %536, %v534
        %v538 = vpop.permute.xlu0 %537
        %539 = vset.pattern.permute.xlu0 0
        %540 = vperm.xlu0 %539, %v535
        %v541 = vpop.permute.xlu0 %540
        %vm542 = vcmp.eq.s32.totalorder %v538, 1
        %vm543 = vcmp.eq.s32.totalorder %v541, 1
        %v544 = vsel %vm542, %v531, %v528
        %v545 = vsel %vm543, %v533, %v529
        %546 = vrot.lane.b32.xlu0 %v544, 64
        %v547 = vpop.permute.xlu0 %546
        %548 = vrot.lane.b32.xlu0 %v545, 64
        %v549 = vpop.permute.xlu0 %548
        %v550 = vsel %vm410, 1, 0
        %v551 = vsel %vm411, 1, 0
        %552 = vset.pattern.permute.xlu0 0
        %553 = vperm.xlu0 %552, %v550
        %v554 = vpop.permute.xlu0 %553
        %555 = vset.pattern.permute.xlu0 0
        %556 = vperm.xlu0 %555, %v551
        %v557 = vpop.permute.xlu0 %556
        %vm558 = vcmp.eq.s32.totalorder %v554, 1
        %vm559 = vcmp.eq.s32.totalorder %v557, 1
        %v560 = vsel %vm558, %v547, %v544
        %v561 = vsel %vm559, %v549, %v545
        %562 = vrot.lane.b32.xlu0 %v560, 127
        %v563 = vpop.permute.xlu0 %562
        %564 = vrot.lane.b32.xlu0 %v561, 127
        %v565 = vpop.permute.xlu0 %564
        %v566 = vsel %vm376, %v560, 0.0
        %v567 = vsel %vm377, %v561, 0.0
        %v568 = vsel %vm382, %v563, 0.0
        %v569 = vsel %vm383, %v565, 0.0
        %v570 = vsub.f32 1.0, %v356
        %v571 = vsub.f32 1.0, %v357
        %573 = vset.pattern.permute.xlu0 0
        %574 = vperm.xlu0 %573, %v570
        %v575 = vpop.permute.xlu0 %574
        %578 = vset.pattern.permute.xlu0 0
        %579 = vperm.xlu0 %578, %v571
        %v580 = vpop.permute.xlu0 %579
        %v582 = vmul.f32 %v575, %v566
        %v583 = vmul.f32 %v580, %v567
        %585 = vset.pattern.permute.xlu0 0
        %586 = vperm.xlu0 %585, %v356
        %v587 = vpop.permute.xlu0 %586
        %590 = vset.pattern.permute.xlu0 0
        %591 = vperm.xlu0 %590, %v357
        %v592 = vpop.permute.xlu0 %591
        %v594 = vmul.f32 %v587, %v568
        %v595 = vmul.f32 %v592, %v569
        %v596 = vadd.f32 %v582, %v594
        %v597 = vadd.f32 %v583, %v595
        %598 = vst.msk [vmem:[%s325] sm:$0xff] %vm445, %v596
        %599 = vst.msk [vmem:[%s325 + $0x8] sm:$0xff] %vm445, %v597
        %s600 = scalar_lea.vmem %s279, 32 [#allocation3]
        %v601 = vld [vmem:[%s600] sm:$0xff]
        %v602 = vld [vmem:[%s600 + $0x8] sm:$0xff]
        %s603 = scalar_lea.vmem %s279, 48 [#allocation3]
        %v604 = vld [vmem:[%s603] sm:$0xff]
        %v605 = vld [vmem:[%s603 + $0x8] sm:$0xff]
        %v606 = vmul.f32 %v422, %v604
        %v607 = vmul.f32 %v427, %v605
        %v608 = vmul.f32 %v434, %v601
        %v609 = vmul.f32 %v439, %v602
        %v610 = vadd.f32 %v606, %v608
        %v611 = vadd.f32 %v607, %v609
        %612 = vst.msk [vmem:[#allocation2] sm:$0xff] %vm445, %v610
        %613 = vst.msk [vmem:[#allocation2 + $0x8] sm:$0xff] %vm445, %v611
        %v614 = vld [vmem:[#allocation2] sm:$0xff]
        %v615 = vld [vmem:[#allocation2 + $0x8] sm:$0xff]
        %616 = vrot.lane.b32.xlu0 %v614, 1
        %v617 = vpop.permute.xlu0 %616
        %618 = vrot.lane.b32.xlu0 %v615, 1
        %v619 = vpop.permute.xlu0 %618
        %v620 = vsel %vm462, %v617, %v614
        %v621 = vsel %vm463, %v619, %v615
        %622 = vrot.lane.b32.xlu0 %v620, 2
        %v623 = vpop.permute.xlu0 %622
        %624 = vrot.lane.b32.xlu0 %v621, 2
        %v625 = vpop.permute.xlu0 %624
        %v626 = vsel %vm478, %v623, %v620
        %v627 = vsel %vm479, %v625, %v621
        %628 = vrot.lane.b32.xlu0 %v626, 4
        %v629 = vpop.permute.xlu0 %628
        %630 = vrot.lane.b32.xlu0 %v627, 4
        %v631 = vpop.permute.xlu0 %630
        %v632 = vsel %vm494, %v629, %v626
        %v633 = vsel %vm495, %v631, %v627
        %634 = vrot.lane.b32.xlu0 %v632, 8
        %v635 = vpop.permute.xlu0 %634
        %636 = vrot.lane.b32.xlu0 %v633, 8
        %v637 = vpop.permute.xlu0 %636
        %v638 = vsel %vm510, %v635, %v632
        %v639 = vsel %vm511, %v637, %v633
        %640 = vrot.lane.b32.xlu0 %v638, 16
        %v641 = vpop.permute.xlu0 %640
        %642 = vrot.lane.b32.xlu0 %v639, 16
        %v643 = vpop.permute.xlu0 %642
        %v644 = vsel %vm526, %v641, %v638
        %v645 = vsel %vm527, %v643, %v639
        %646 = vrot.lane.b32.xlu0 %v644, 32
        %v647 = vpop.permute.xlu0 %646
        %648 = vrot.lane.b32.xlu0 %v645, 32
        %v649 = vpop.permute.xlu0 %648
        %v650 = vsel %vm542, %v647, %v644
        %v651 = vsel %vm543, %v649, %v645
        %652 = vrot.lane.b32.xlu0 %v650, 64
        %v653 = vpop.permute.xlu0 %652
        %654 = vrot.lane.b32.xlu0 %v651, 64
        %v655 = vpop.permute.xlu0 %654
        %v656 = vsel %vm558, %v653, %v650
        %v657 = vsel %vm559, %v655, %v651
        %658 = vrot.lane.b32.xlu0 %v656, 127
        %v659 = vpop.permute.xlu0 %658
        %660 = vrot.lane.b32.xlu0 %v657, 127
        %v661 = vpop.permute.xlu0 %660
        %v662 = vsel %vm376, %v656, 0.0
        %v663 = vsel %vm377, %v657, 0.0
        %v664 = vsel %vm382, %v659, 0.0
        %v665 = vsel %vm383, %v661, 0.0
        %v666 = vmul.f32 %v575, %v662
        %v667 = vmul.f32 %v580, %v663
        %v668 = vmul.f32 %v587, %v664
        %v669 = vmul.f32 %v592, %v665
        %v670 = vadd.f32 %v666, %v668
        %v671 = vadd.f32 %v667, %v669
        %s672 = scalar_lea.vmem %s325, 16 [#allocation6]
        %673 = vst.msk [vmem:[%s672] sm:$0xff] %vm445, %v670
        %674 = vst.msk [vmem:[%s672 + $0x8] sm:$0xff] %vm445, %v671
        %s675 = scalar_lea.vmem %s279, 64 [#allocation3]
        %v676 = vld [vmem:[%s675] sm:$0xff]
        %v677 = vld [vmem:[%s675 + $0x8] sm:$0xff]
        %s678 = scalar_lea.vmem %s279, 80 [#allocation3]
        %v679 = vld [vmem:[%s678] sm:$0xff]
        %v680 = vld [vmem:[%s678 + $0x8] sm:$0xff]
        %v681 = vmul.f32 %v422, %v679
        %v682 = vmul.f32 %v427, %v680
        %v683 = vmul.f32 %v434, %v676
        %v684 = vmul.f32 %v439, %v677
        %v685 = vadd.f32 %v681, %v683
        %v686 = vadd.f32 %v682, %v684
        %687 = vst.msk [vmem:[#allocation2] sm:$0xff] %vm445, %v685
        %688 = vst.msk [vmem:[#allocation2 + $0x8] sm:$0xff] %vm445, %v686
        %v689 = vld [vmem:[#allocation2] sm:$0xff]
        %v690 = vld [vmem:[#allocation2 + $0x8] sm:$0xff]
        %691 = vrot.lane.b32.xlu0 %v689, 1
        %v692 = vpop.permute.xlu0 %691
        %693 = vrot.lane.b32.xlu0 %v690, 1
        %v694 = vpop.permute.xlu0 %693
        %v695 = vsel %vm462, %v692, %v689
        %v696 = vsel %vm463, %v694, %v690
        %697 = vrot.lane.b32.xlu0 %v695, 2
        %v698 = vpop.permute.xlu0 %697
        %699 = vrot.lane.b32.xlu0 %v696, 2
        %v700 = vpop.permute.xlu0 %699
        %v701 = vsel %vm478, %v698, %v695
        %v702 = vsel %vm479, %v700, %v696
        %703 = vrot.lane.b32.xlu0 %v701, 4
        %v704 = vpop.permute.xlu0 %703
        %705 = vrot.lane.b32.xlu0 %v702, 4
        %v706 = vpop.permute.xlu0 %705
        %v707 = vsel %vm494, %v704, %v701
        %v708 = vsel %vm495, %v706, %v702
        %709 = vrot.lane.b32.xlu0 %v707, 8
        %v710 = vpop.permute.xlu0 %709
        %711 = vrot.lane.b32.xlu0 %v708, 8
        %v712 = vpop.permute.xlu0 %711
        %v713 = vsel %vm510, %v710, %v707
        %v714 = vsel %vm511, %v712, %v708
        %715 = vrot.lane.b32.xlu0 %v713, 16
        %v716 = vpop.permute.xlu0 %715
        %717 = vrot.lane.b32.xlu0 %v714, 16
        %v718 = vpop.permute.xlu0 %717
        %v719 = vsel %vm526, %v716, %v713
        %v720 = vsel %vm527, %v718, %v714
        %721 = vrot.lane.b32.xlu0 %v719, 32
        %v722 = vpop.permute.xlu0 %721
        %723 = vrot.lane.b32.xlu0 %v720, 32
        %v724 = vpop.permute.xlu0 %723
        %v725 = vsel %vm542, %v722, %v719
        %v726 = vsel %vm543, %v724, %v720
        %727 = vrot.lane.b32.xlu0 %v725, 64
        %v728 = vpop.permute.xlu0 %727
        %729 = vrot.lane.b32.xlu0 %v726, 64
        %v730 = vpop.permute.xlu0 %729
        %v731 = vsel %vm558, %v728, %v725
        %v732 = vsel %vm559, %v730, %v726
        %733 = vrot.lane.b32.xlu0 %v731, 127
        %v734 = vpop.permute.xlu0 %733
        %735 = vrot.lane.b32.xlu0 %v732, 127
        %v736 = vpop.permute.xlu0 %735
        %v737 = vsel %vm376, %v731, 0.0
        %v738 = vsel %vm377, %v732, 0.0
        %v739 = vsel %vm382, %v734, 0.0
        %v740 = vsel %vm383, %v736, 0.0
        %v741 = vmul.f32 %v575, %v737
        %v742 = vmul.f32 %v580, %v738
        %v743 = vmul.f32 %v587, %v739
        %v744 = vmul.f32 %v592, %v740
        %v745 = vadd.f32 %v741, %v743
        %v746 = vadd.f32 %v742, %v744
        %s747 = scalar_lea.vmem %s325, 32 [#allocation6]
        %748 = vst.msk [vmem:[%s747] sm:$0xff] %vm445, %v745
        %749 = vst.msk [vmem:[%s747 + $0x8] sm:$0xff] %vm445, %v746
        %s750 = scalar_lea.vmem %s279, 96 [#allocation3]
        %v751 = vld [vmem:[%s750] sm:$0xff]
        %v752 = vld [vmem:[%s750 + $0x8] sm:$0xff]
        %s753 = scalar_lea.vmem %s279, 112 [#allocation3]
        %v754 = vld [vmem:[%s753] sm:$0xff]
        %v755 = vld [vmem:[%s753 + $0x8] sm:$0xff]
        %v756 = vmul.f32 %v422, %v754
        %v757 = vmul.f32 %v427, %v755
        %v758 = vmul.f32 %v434, %v751
        %v759 = vmul.f32 %v439, %v752
        %v760 = vadd.f32 %v756, %v758
        %v761 = vadd.f32 %v757, %v759
        %762 = vst.msk [vmem:[#allocation2] sm:$0xff] %vm445, %v760
        %763 = vst.msk [vmem:[#allocation2 + $0x8] sm:$0xff] %vm445, %v761
        %v764 = vld [vmem:[#allocation2] sm:$0xff]
        %v765 = vld [vmem:[#allocation2 + $0x8] sm:$0xff]
        %766 = vrot.lane.b32.xlu0 %v764, 1
        %v767 = vpop.permute.xlu0 %766
        %768 = vrot.lane.b32.xlu0 %v765, 1
        %v769 = vpop.permute.xlu0 %768
        %v770 = vsel %vm462, %v767, %v764
        %v771 = vsel %vm463, %v769, %v765
        %772 = vrot.lane.b32.xlu0 %v770, 2
        %v773 = vpop.permute.xlu0 %772
        %774 = vrot.lane.b32.xlu0 %v771, 2
        %v775 = vpop.permute.xlu0 %774
        %v776 = vsel %vm478, %v773, %v770
        %v777 = vsel %vm479, %v775, %v771
        %778 = vrot.lane.b32.xlu0 %v776, 4
        %v779 = vpop.permute.xlu0 %778
        %780 = vrot.lane.b32.xlu0 %v777, 4
        %v781 = vpop.permute.xlu0 %780
        %v782 = vsel %vm494, %v779, %v776
        %v783 = vsel %vm495, %v781, %v777
        %784 = vrot.lane.b32.xlu0 %v782, 8
        %v785 = vpop.permute.xlu0 %784
        %786 = vrot.lane.b32.xlu0 %v783, 8
        %v787 = vpop.permute.xlu0 %786
        %v788 = vsel %vm510, %v785, %v782
        %v789 = vsel %vm511, %v787, %v783
        %790 = vrot.lane.b32.xlu0 %v788, 16
        %v791 = vpop.permute.xlu0 %790
        %792 = vrot.lane.b32.xlu0 %v789, 16
        %v793 = vpop.permute.xlu0 %792
        %v794 = vsel %vm526, %v791, %v788
        %v795 = vsel %vm527, %v793, %v789
        %796 = vrot.lane.b32.xlu0 %v794, 32
        %v797 = vpop.permute.xlu0 %796
        %798 = vrot.lane.b32.xlu0 %v795, 32
        %v799 = vpop.permute.xlu0 %798
        %v800 = vsel %vm542, %v797, %v794
        %v801 = vsel %vm543, %v799, %v795
        %802 = vrot.lane.b32.xlu0 %v800, 64
        %v803 = vpop.permute.xlu0 %802
        %804 = vrot.lane.b32.xlu0 %v801, 64
        %v805 = vpop.permute.xlu0 %804
        %v806 = vsel %vm558, %v803, %v800
        %v807 = vsel %vm559, %v805, %v801
        %808 = vrot.lane.b32.xlu0 %v806, 127
        %v809 = vpop.permute.xlu0 %808
        %810 = vrot.lane.b32.xlu0 %v807, 127
        %v811 = vpop.permute.xlu0 %810
        %v812 = vsel %vm376, %v806, 0.0
        %v813 = vsel %vm377, %v807, 0.0
        %v814 = vsel %vm382, %v809, 0.0
        %v815 = vsel %vm383, %v811, 0.0
        %v816 = vmul.f32 %v575, %v812
        %v817 = vmul.f32 %v580, %v813
        %v818 = vmul.f32 %v587, %v814
        %v819 = vmul.f32 %v592, %v815
        %v820 = vadd.f32 %v816, %v818
        %v821 = vadd.f32 %v817, %v819
        %s822 = scalar_lea.vmem %s325, 48 [#allocation6]
        %823 = vst.msk [vmem:[%s822] sm:$0xff] %vm445, %v820
        %824 = vst.msk [vmem:[%s822 + $0x8] sm:$0xff] %vm445, %v821
        %s825 = sand.u32 %s176, 1
        %s826 = scalar_lea.sflag [#allocation5], %s825
        %s827 = sand.u32 %s176, 1
        %s828 = smul.addr %s827, 64
        %s829 = scalar_lea.vmem [#allocation6], %s828
        // Predicated region
        $region45: #{tpu_custom_call.1} parent=39 // pred_check
          %p830 = pneg %p186
        $region46: #{tpu_custom_call.1} parent=39 // pred_check_branch
          %832 = sbr.rel (%p830) target = $region48
        $region47: #{tpu_custom_call.1} parent=39 // pred_region
          %s833 = smul.u32 4, %s26
          %s834 = smul.u32 2, %s27
          %s836 = ssub.s32 1024, 1024
          %837 = vsyncadd %s826, %s836
          %s838 = smul.addr %s833, 2
          %s839 = sadd.s32 %s834, %s838
          %s840 = smul.addr %s839, 128
          %s841 = scalar_lea.hbm %s5, %s840
          %s842 = sshll.u32 %s829, 4
          %s843 = int_to_ptr.vmem [resolvable:$true] %s842
          %848 = dma.vmem_to_hbm [thread:$0]  %s843, 1024, %s841, %s826, 128, 128, 8
        $region48: #{tpu_custom_call.1} parent=39 // pred_fallthru
          _
      $region40: #{tpu_custom_call.1} parent=5 // pred_fallthru
        _
      %p849 = scmp.le.s32.totalorder 2, %s17
      // Predicated region
      $region49: #{tpu_custom_call.1} parent=5 // pred_check
        %p850 = pneg %p849
      $region50: #{tpu_custom_call.1} parent=5 // pred_check_branch
        %852 = sbr.rel (%p850) target = $region52
      $region51: #{tpu_custom_call.1} parent=5 // pred_region
        %s853 = ssub.s32 %s17, 2
        // Predicated region
        $region53: #{tpu_custom_call.1} parent=51 // pred_check
          %p854 = pneg %p192
        $region54: #{tpu_custom_call.1} parent=51 // pred_check_branch
          %856 = sbr.rel (%p854) target = $region56
        $region55: #{tpu_custom_call.1} parent=51 // pred_region
          %s857 = sand.u32 %s177, 1
          %s858 = scalar_lea.sflag [#allocation5], %s857
          %s859 = sand.u32 %s177, 1
          %s860 = smul.addr %s859, 64
          %s861 = scalar_lea.vmem [#allocation6], %s860
          %862 = dma.done %s858, 1024
        $region56: #{tpu_custom_call.1} parent=51 // pred_fallthru
          _
      $region52: #{tpu_custom_call.1} parent=5 // pred_fallthru
        _
    $region6: #{tpu_custom_call.1} parent=1 // loop_footer
      %s21 = sadd.s32 1, %s17
    $region7: #{tpu_custom_call.1} parent=1 // loop_footer_branch
      %16 = sbr.rel target = $region3
    $region8: #{tpu_custom_call.1} parent=1 // loop_exit
      _
    %863 = vsyncpa [#allocation4], 1
    %s864 = scalar_lea.sflag [#allocation4], 1
    %865 = vsyncpa %s864, 1
    %866 = vsyncpa [#allocation5], 1
    %s867 = scalar_lea.sflag [#allocation5], 1
    %868 = vsyncpa %s867, 1

</llo_original>
